<compile_context>
chip_gen: v7x
topology: tpu7x:2x2x1
jax: 0.10.0
libtpu: 0.0.40
codegen_flags: <defaults>
</compile_context>

<pallas_src>
import math
import functools

import numpy as np
import jax
import jax.numpy as jnp
from jax import lax
from jax.experimental import pallas as pl
from jax.experimental.pallas import tpu as pltpu


def _vmem_limit_bytes():
    """~3/4 of this chip's per-core VMEM, capped at 96 MiB (v5e/v6e -> 96 MiB, v7x -> 48 MiB)."""
    cap = 0
    try:
        cap = int(getattr(pltpu.get_tpu_info(), "vmem_capacity_bytes", 0) or 0)
    except Exception:
        cap = 0
    if cap <= 0:
        cap = 64 * 1024 * 1024          # conservative fallback = v7x per-TC VMEM
    return min(cap * 3 // 4, 96 * 1024 * 1024)


_VMEM_LIMIT = _vmem_limit_bytes()


def _pick_tile(dim, preferred, quantum):
    """Largest multiple of `quantum` <= preferred that divides `dim`; else the full dim.

    Keeps block shapes either (8,128)-aligned or equal to the full array dim so the BlockSpec
    constraint is always satisfied; small/test shapes degrade to a single block.
    """
    t = min(preferred, dim)
    t -= t % quantum
    while t >= quantum:
        if dim % t == 0:
            return t
        t -= quantum
    return dim


# --------------------------------------------------------------------------------------
# Tiled linear projection:  y = x @ W + b
# --------------------------------------------------------------------------------------
def _linear_kernel(x_ref, w_ref, b_ref, o_ref, acc_ref):
    k = pl.program_id(2)

    @pl.when(k == 0)
    def _():
        acc_ref[...] = jnp.zeros_like(acc_ref)

    # Operands stay in their storage dtype (bf16 on v6e/v7x configs); f32 accumulation.
    acc_ref[...] += jnp.dot(x_ref[...], w_ref[...], preferred_element_type=jnp.float32)

    @pl.when(k == pl.num_programs(2) - 1)
    def _():
        o_ref[...] = (acc_ref[...] + b_ref[...].astype(jnp.float32)).astype(o_ref.dtype)


def pallas_linear(x2d, w_t, b, *, tm=512, tn=512, tk=1024):
    """y = x2d @ w_t + b with a pipelined, tiled Pallas matmul kernel (w_t is (K, N))."""
    M, K = x2d.shape
    N = w_t.shape[1]
    tm = _pick_tile(M, tm, 8)      # sublane axis of x / out
    tn = _pick_tile(N, tn, 128)    # lane axis of w / out
    tk = _pick_tile(K, tk, 128)    # lane axis of x, sublane axis of w
    grid = (M // tm, N // tn, K // tk)    # reduction axis last
    return pl.pallas_call(
        _linear_kernel,
        out_shape=jax.ShapeDtypeStruct((M, N), x2d.dtype),
        grid=grid,
        in_specs=[
            pl.BlockSpec((tm, tk), lambda i, j, k: (i, k)),
            pl.BlockSpec((tk, tn), lambda i, j, k: (k, j)),
            pl.BlockSpec((1, tn), lambda i, j, k: (0, j)),
        ],
        out_specs=pl.BlockSpec((tm, tn), lambda i, j, k: (i, j)),
        scratch_shapes=[pltpu.VMEM((tm, tn), jnp.float32)],
        compiler_params=pltpu.CompilerParams(
            dimension_semantics=("parallel", "parallel", "arbitrary"),
            vmem_limit_bytes=_VMEM_LIMIT,
        ),
    )(x2d, w_t, b.reshape(1, N))


# --------------------------------------------------------------------------------------
# Flash-style attention (default path: no attention-weights output)
# --------------------------------------------------------------------------------------
def _flash_kernel(q_ref, k_ref, v_ref, o_ref, m_ref, l_ref, acc_ref,
                  *, num_heads, head_dim, q_off, k_off, v_off):
    # q_ref : (tq,  E or 3E) — Q columns for this q tile   (offset q_off)
    # k_ref : (tkv, E or 3E) — K columns for this kv tile  (offset k_off)
    # v_ref : (tkv, E or 3E) — V columns for this kv tile  (offset v_off)
    # o_ref : (tq,  E)       — merged-head output tile (lane-dense)
    ki = pl.program_id(2)

    @pl.when(ki == 0)
    def _():
        m_ref[...] = jnp.full_like(m_ref, -jnp.inf)
        l_ref[...] = jnp.zeros_like(l_ref)
        acc_ref[...] = jnp.zeros_like(acc_ref)

    for h in range(num_heads):
        q = q_ref[:, q_off + h * head_dim: q_off + (h + 1) * head_dim]       # (tq,  Dh)
        k = k_ref[:, k_off + h * head_dim: k_off + (h + 1) * head_dim]       # (tkv, Dh)
        v = v_ref[:, v_off + h * head_dim: v_off + (h + 1) * head_dim]       # (tkv, Dh)

        # 1/sqrt(Dh) is already folded into the Q projection weights.
        # QK^T: contract last dims directly (no materialized k.T); f32 accumulation.
        s = lax.dot_general(q, k, (((1,), (1,)), ((), ())),
                            preferred_element_type=jnp.float32)              # (tq, tkv)

        m_prev = m_ref[h]                                                    # (tq, 1)
        m_new = jnp.maximum(m_prev, jnp.max(s, axis=-1, keepdims=True))
        alpha = jnp.exp(m_prev - m_new)
        p = jnp.exp(s - m_new)                                               # (tq, tkv) f32
        l_ref[h] = alpha * l_ref[h] + jnp.sum(p, axis=-1, keepdims=True)
        acc_ref[h] = alpha * acc_ref[h] + lax.dot_general(
            p.astype(v.dtype), v, (((1,), (0,)), ((), ())),
            preferred_element_type=jnp.float32)                              # (tq, Dh)
        m_ref[h] = m_new

    @pl.when(ki == pl.num_programs(2) - 1)
    def _():
        for h in range(num_heads):
            # EUP reciprocal + one Newton step (cheap on (tq, 1)) -> near-exact 1/l.
            inv = pl.reciprocal(l_ref[h], approx=True)
            inv = inv * (2.0 - l_ref[h] * inv)
            # Per-head direct column store: bounds live ranges, no big concatenate/relayout.
            o_ref[:, h * head_dim:(h + 1) * head_dim] = (acc_ref[h] * inv).astype(o_ref.dtype)


def pallas_flash_attention(qkv, num_heads, head_dim, *, tq=256, tkv=256):
    """Scaled dot-product attention over the fused QKV projection.

    qkv: (B, S, 3E) in the contiguous [Q_all | K_all | V_all] layout produced by prepare_params.
    Returns merged-head (B, S, E).
    """
    B, S, three_e = qkv.shape
    E = num_heads * head_dim
    tq = _pick_tile(S, tq, 8)      # sublane axis of the score tensor
    tkv = _pick_tile(S, tkv, 128)  # lane axis of the score tensor / PV contraction depth

    split = (E % 128 == 0)
    if split:
        # E-wide blocks: q tile DMAs E (not 3E) columns; each kv step DMAs 2E (not 3E).
        in_specs = [
            pl.BlockSpec((None, tq, E), lambda b, qi, ki: (b, qi, 0)),
            pl.BlockSpec((None, tkv, E), lambda b, qi, ki: (b, ki, 1)),
            pl.BlockSpec((None, tkv, E), lambda b, qi, ki: (b, ki, 2)),
        ]
        offs = (0, 0, 0)
    else:
        # Lane-unaligned E: fall back to full-3E slabs (extra DMA, but always legal).
        in_specs = [
            pl.BlockSpec((None, tq, three_e), lambda b, qi, ki: (b, qi, 0)),
            pl.BlockSpec((None, tkv, three_e), lambda b, qi, ki: (b, ki, 0)),
            pl.BlockSpec((None, tkv, three_e), lambda b, qi, ki: (b, ki, 0)),
        ]
        offs = (0, E, 2 * E)

    kernel = functools.partial(_flash_kernel, num_heads=num_heads, head_dim=head_dim,
                               q_off=offs[0], k_off=offs[1], v_off=offs[2])
    return pl.pallas_call(
        kernel,
        out_shape=jax.ShapeDtypeStruct((B, S, E), qkv.dtype),
        grid=(B, S // tq, S // tkv),
        in_specs=in_specs,
        out_specs=pl.BlockSpec((None, tq, E), lambda b, qi, ki: (b, qi, 0)),
        scratch_shapes=[
            pltpu.VMEM((num_heads, tq, 1), jnp.float32),           # running max
            pltpu.VMEM((num_heads, tq, 1), jnp.float32),           # running denom
            pltpu.VMEM((num_heads, tq, head_dim), jnp.float32),    # running PV accumulator
        ],
        compiler_params=pltpu.CompilerParams(
            dimension_semantics=("parallel", "parallel", "arbitrary"),
            vmem_limit_bytes=_VMEM_LIMIT,
        ),
    )(qkv, qkv, qkv)


# --------------------------------------------------------------------------------------
# Attention variant that also returns the full attention weights (return_attention=True)
# --------------------------------------------------------------------------------------
def _sdpa_weights_kernel(q_ref, k_ref, v_ref, o_ref, attn_ref,
                         *, num_heads, head_dim, q_off, k_off, v_off):
    # q_ref: (tq, .), k_ref/v_ref: (S, .), o_ref: (tq, E), attn_ref: (H, tq, S)
    for h in range(num_heads):
        q = q_ref[:, q_off + h * head_dim: q_off + (h + 1) * head_dim]
        k = k_ref[:, k_off + h * head_dim: k_off + (h + 1) * head_dim]
        v = v_ref[:, v_off + h * head_dim: v_off + (h + 1) * head_dim]
        s = lax.dot_general(q, k, (((1,), (1,)), ((), ())),
                            preferred_element_type=jnp.float32)              # (tq, S)
        s = s - jnp.max(s, axis=-1, keepdims=True)
        e = jnp.exp(s)
        p = e / jnp.sum(e, axis=-1, keepdims=True)
        attn_ref[h] = p.astype(attn_ref.dtype)
        o_ref[:, h * head_dim:(h + 1) * head_dim] = lax.dot_general(
            p.astype(v.dtype), v, (((1,), (0,)), ((), ())),
            preferred_element_type=jnp.float32).astype(o_ref.dtype)


def pallas_attention_with_weights(qkv, num_heads, head_dim, *, tq=256):
    """Attention that also emits (B, H, S, S) weights; q-tiled so the weights block is (H, tq, S)."""
    B, S, three_e = qkv.shape
    E = num_heads * head_dim
    tq = _pick_tile(S, tq, 8)

    split = (E % 128 == 0)
    if split:
        in_specs = [
            pl.BlockSpec((None, tq, E), lambda b, qi: (b, qi, 0)),
            pl.BlockSpec((None, S, E), lambda b, qi: (b, 0, 1)),
            pl.BlockSpec((None, S, E), lambda b, qi: (b, 0, 2)),
        ]
        offs = (0, 0, 0)
    else:
        in_specs = [
            pl.BlockSpec((None, tq, three_e), lambda b, qi: (b, qi, 0)),
            pl.BlockSpec((None, S, three_e), lambda b, qi: (b, 0, 0)),
            pl.BlockSpec((None, S, three_e), lambda b, qi: (b, 0, 0)),
        ]
        offs = (0, E, 2 * E)

    kernel = functools.partial(_sdpa_weights_kernel, num_heads=num_heads, head_dim=head_dim,
                               q_off=offs[0], k_off=offs[1], v_off=offs[2])
    return pl.pallas_call(
        kernel,
        out_shape=(
            jax.ShapeDtypeStruct((B, S, E), qkv.dtype),
            jax.ShapeDtypeStruct((B, num_heads, S, S), jnp.float32),
        ),
        grid=(B, S // tq),
        in_specs=in_specs,
        out_specs=(
            pl.BlockSpec((None, tq, E), lambda b, qi: (b, qi, 0)),
            pl.BlockSpec((None, num_heads, tq, S), lambda b, qi: (b, 0, qi, 0)),
        ),
        compiler_params=pltpu.CompilerParams(
            dimension_semantics=("parallel", "parallel"),
            vmem_limit_bytes=_VMEM_LIMIT,
        ),
    )(qkv, qkv, qkv)


# --------------------------------------------------------------------------------------
# Parameters: torch-layout init + one-time preparation into the kernel-friendly layout
# --------------------------------------------------------------------------------------
def init_params(key, embedding_dim):
    """Same layout as the torch module: nn.Linear(E, 3E) and nn.Linear(E, E)."""
    k1, k2, k3, k4 = jax.random.split(key, 4)
    bound = 1.0 / math.sqrt(embedding_dim)
    return {
        "w_in": jax.random.uniform(k1, (3 * embedding_dim, embedding_dim),
                                   jnp.float32, -bound, bound),
        "b_in": jax.random.uniform(k2, (3 * embedding_dim,), jnp.float32, -bound, bound),
        "w_out": jax.random.uniform(k3, (embedding_dim, embedding_dim),
                                    jnp.float32, -bound, bound),
        "b_out": jax.random.uniform(k4, (embedding_dim,), jnp.float32, -bound, bound),
    }


def prepare_params(params, num_heads, dtype=None):
    """One-time (per model) preparation:
       - transpose w_in/w_out to (K, N) so the pallas_linear RHS is MXU-ready,
       - permute the fused-QKV columns from the per-head-interleaved [q_h|k_h|v_h] torch layout
         to contiguous [Q_all | K_all | V_all],
       - fold 1/sqrt(head_dim) into the Q columns (weights + bias),
       - optionally cast weights to bf16 (fp8 on v7x would slot in here too).  Biases stay f32.
    """
    w_in, b_in = params["w_in"], params["b_in"]
    w_out, b_out = params["w_out"], params["b_out"]
    E = w_in.shape[1]
    Dh = E // num_heads
    scale = 1.0 / math.sqrt(Dh)

    # new column j = part*E + h*Dh + d  <-  old column h*3Dh + part*Dh + d
    perm = np.concatenate([
        np.arange(h * 3 * Dh + p * Dh, h * 3 * Dh + (p + 1) * Dh)
        for p in range(3) for h in range(num_heads)
    ])
    col_scale = jnp.concatenate([
        jnp.full((E,), scale, dtype=jnp.float32),
        jnp.ones((2 * E,), dtype=jnp.float32),
    ])
    w_in_t = jnp.transpose(w_in).astype(jnp.float32)[:, perm] * col_scale[None, :]   # (E, 3E)
    b_in_p = b_in.astype(jnp.float32)[perm] * col_scale                              # (3E,)
    w_out_t = jnp.transpose(w_out)                                                   # (E, E)

    if dtype is not None:
        w_in_t = w_in_t.astype(dtype)
        w_out_t = w_out_t.astype(dtype)
    return {
        "w_in_t": w_in_t, "b_in": b_in_p.astype(jnp.float32),
        "w_out_t": w_out_t, "b_out": b_out.astype(jnp.float32),
    }


# --------------------------------------------------------------------------------------
# Module wrapper (mirrors MultiheadAttention.forward, mask=None)
# --------------------------------------------------------------------------------------
def multihead_attention(x, prepared, num_heads, return_attention=False):
    B, S, E = x.shape
    head_dim = E // num_heads
    dtype = prepared["w_in_t"].dtype

    # QKV projection (tiled Pallas matmul) -> contiguous Q|K|V columns, scale pre-folded.
    x2 = x.astype(dtype).reshape(B * S, E)
    qkv = pallas_linear(x2, prepared["w_in_t"], prepared["b_in"]).reshape(B, S, 3 * E)

    if return_attention:
        values, attention = pallas_attention_with_weights(qkv, num_heads, head_dim)
    else:
        values = pallas_flash_attention(qkv, num_heads, head_dim)
        attention = None

    # values is already merged-head (B, S, E) -> feed the output projection directly.
    out = pallas_linear(values.reshape(B * S, E), prepared["w_out_t"],
                        prepared["b_out"]).reshape(B, S, E)
    if return_attention:
        return out, attention
    return out


# --------------------------------------------------------------------------------------
# Plain-JAX reference (torch-layout params; for correctness check)
# --------------------------------------------------------------------------------------
def reference(x, params, num_heads):
    B, S, E = x.shape
    Dh = E // num_heads
    qkv = x @ params["w_in"].T + params["b_in"]
    qkv = qkv.reshape(B, S, num_heads, 3 * Dh).transpose(0, 2, 1, 3)
    q, k, v = qkv[..., :Dh], qkv[..., Dh:2 * Dh], qkv[..., 2 * Dh:]
    s = jnp.einsum("bhqd,bhkd->bhqk", q, k) / math.sqrt(Dh)
    p = jax.nn.softmax(s, axis=-1)
    vals = jnp.einsum("bhqk,bhkd->bhqd", p, v)
    vals = vals.transpose(0, 2, 1, 3).reshape(B, S, E)
    return vals @ params["w_out"].T + params["b_out"], p


if __name__ == "__main__":
    key = jax.random.PRNGKey(0)
    kx, kp, kx2, kp2 = jax.random.split(key, 4)

    # --- Test 1: small shapes implied by the module (E=32 -> lane-unaligned fallback path) ---
    B, S, E, H = 2, 8, 32, 4
    x = jax.random.normal(kx, (B, S, E), dtype=jnp.float32)
    params = init_params(kp, E)
    prepared = prepare_params(params, H)

    out = jax.block_until_ready(multihead_attention(x, prepared, H))
    out_w, attn = jax.block_until_ready(multihead_attention(x, prepared, H, return_attention=True))

    ref_out, ref_attn = reference(x, params, H)
    assert out.shape == (B, S, E) and attn.shape == (B, H, S, S)
    assert jnp.allclose(out, ref_out, atol=1e-4, rtol=1e-4), "flash output mismatch"
    assert jnp.allclose(out_w, ref_out, atol=1e-4, rtol=1e-4), "weights-path output mismatch"
    assert jnp.allclose(attn, ref_attn, atol=1e-5, rtol=1e-5), "attention mismatch"

    # --- Test 2: shapes that exercise real tiling (E=256 -> E-wide Q/K/V blocks, 2 KV steps,
    #             multi-block linear grid, q-tiled weights path) ---
    B2, S2, E2, H2 = 2, 512, 256, 4
    x2 = jax.random.normal(kx2, (B2, S2, E2), dtype=jnp.float32)
    params2 = init_params(kp2, E2)
    prepared2 = prepare_params(params2, H2)

    out2 = jax.block_until_ready(multihead_attention(x2, prepared2, H2))
    ref2, ref2_attn = reference(x2, params2, H2)
    assert jnp.allclose(out2, ref2, atol=1e-3, rtol=1e-3), "tiled flash output mismatch"

    out2w, attn2 = jax.block_until_ready(
        multihead_attention(x2, prepared2, H2, return_attention=True))
    assert jnp.allclose(out2w, ref2, atol=1e-3, rtol=1e-3), "tiled weights-path output mismatch"
    assert jnp.allclose(attn2, ref2_attn, atol=1e-4, rtol=1e-4), "tiled attention mismatch"

    # --- Test 3: bf16 storage / bf16-MXU configuration (the v6e/v7x perf setting) ---
    prepared_bf16 = prepare_params(params2, H2, dtype=jnp.bfloat16)
    out_bf16 = jax.block_until_ready(
        multihead_attention(x2.astype(jnp.bfloat16), prepared_bf16, H2))
    err = jnp.max(jnp.abs(out_bf16.astype(jnp.float32) - ref2))
    assert bool(jnp.isfinite(err)) and float(err) < 0.2, f"bf16 path error too large: {err}"

    print("KERNEL_OK")
</pallas_src>

<mosaic_0001>
module attributes {stable_mosaic.version = 11 : i64} {
  func.func @_linear_kernel(%arg0: i32, %arg1: i32, %arg2: i32, %arg3: memref<16x32xf32, #tpu.memory_space<vmem>>, %arg4: memref<32x96xf32, #tpu.memory_space<vmem>>, %arg5: memref<1x96xf32, #tpu.memory_space<vmem>>, %arg6: memref<16x96xf32, #tpu.memory_space<vmem>>, %arg7: memref<16x96xf32, #tpu.memory_space<vmem>>) attributes {dimension_semantics = [#tpu.dimension_semantics<parallel>, #tpu.dimension_semantics<parallel>, #tpu.dimension_semantics<arbitrary>], iteration_bounds = array<i64: 1, 1, 1>, scalar_prefetch = 0 : i64, scratch_operands = 1 : i64, tpu.core_type = #tpu.core_type<tc>, window_params = [{transform_indices = @transform_0, window_bounds = array<i64: 16, 32>}, {transform_indices = @transform_1, window_bounds = array<i64: 32, 96>}, {transform_indices = @transform_2, window_bounds = array<i64: 1, 96>}, {transform_indices = @transform_3, window_bounds = array<i64: 16, 96>}]} {
    %c0_i32 = arith.constant 0 : i32
    %0 = arith.cmpi eq, %arg2, %c0_i32 : i32
    %1 = arith.extui %0 : i1 to i32
    %c0_i32_0 = arith.constant 0 : i32
    %2 = arith.cmpi ne, %1, %c0_i32_0 : i32
    scf.if %2 {
      %cst_10 = arith.constant 0.000000e+00 : f32
      %12 = vector.broadcast %cst_10 : f32 to vector<16x96xf32>
      %c0_11 = arith.constant 0 : index
      %c0_12 = arith.constant 0 : index
      %13 = vector.load %arg7[%c0_11, %c0_12] : memref<16x96xf32, #tpu.memory_space<vmem>>, vector<16x96xf32>
      tpu.vector_store %arg7[%c0_11, %c0_12], %12 {strides = array<i32>} : memref<16x96xf32, #tpu.memory_space<vmem>>, vector<16x96xf32>,
    } else {
    }
    %c0 = arith.constant 0 : index
    %c0_1 = arith.constant 0 : index
    %3 = vector.load %arg7[%c0, %c0_1] : memref<16x96xf32, #tpu.memory_space<vmem>>, vector<16x96xf32>
    %c0_2 = arith.constant 0 : index
    %c0_3 = arith.constant 0 : index
    %4 = vector.load %arg3[%c0_2, %c0_3] : memref<16x32xf32, #tpu.memory_space<vmem>>, vector<16x32xf32>
    %c0_4 = arith.constant 0 : index
    %c0_5 = arith.constant 0 : index
    %5 = vector.load %arg4[%c0_4, %c0_5] : memref<32x96xf32, #tpu.memory_space<vmem>>, vector<32x96xf32>
    %cst = arith.constant dense<0.000000e+00> : vector<16x96xf32>
    %6 = tpu.matmul %4, %5, %cst {dimension_numbers = #tpu.dot_dimension_numbers<[1], [0], [0], [1], [0, 0, 1, 1], [], []>} : vector<16x32xf32>, vector<32x96xf32>, vector<16x96xf32> -> vector<16x96xf32>
    %7 = arith.addf %3, %6 : vector<16x96xf32>
    %c0_6 = arith.constant 0 : index
    %c0_7 = arith.constant 0 : index
    %8 = vector.load %arg7[%c0_6, %c0_7] : memref<16x96xf32, #tpu.memory_space<vmem>>, vector<16x96xf32>
    tpu.vector_store %arg7[%c0_6, %c0_7], %7 {strides = array<i32>} : memref<16x96xf32, #tpu.memory_space<vmem>>, vector<16x96xf32>,
    %c0_i32_8 = arith.constant 0 : i32
    %9 = arith.cmpi eq, %arg2, %c0_i32_8 : i32
    %10 = arith.extui %9 : i1 to i32
    %c0_i32_9 = arith.constant 0 : i32
    %11 = arith.cmpi ne, %10, %c0_i32_9 : i32
    scf.if %11 {
      %c0_10 = arith.constant 0 : index
      %c0_11 = arith.constant 0 : index
      %12 = vector.load %arg7[%c0_10, %c0_11] : memref<16x96xf32, #tpu.memory_space<vmem>>, vector<16x96xf32>
      %c0_12 = arith.constant 0 : index
      %c0_13 = arith.constant 0 : index
      %13 = vector.load %arg5[%c0_12, %c0_13] : memref<1x96xf32, #tpu.memory_space<vmem>>, vector<1x96xf32>
      %14 = vector.broadcast %13 : vector<1x96xf32> to vector<16x96xf32>
      %15 = arith.addf %12, %14 : vector<16x96xf32>
      %c0_14 = arith.constant 0 : index
      %c0_15 = arith.constant 0 : index
      %16 = vector.load %arg6[%c0_14, %c0_15] : memref<16x96xf32, #tpu.memory_space<vmem>>, vector<16x96xf32>
      tpu.vector_store %arg6[%c0_14, %c0_15], %15 {strides = array<i32>} : memref<16x96xf32, #tpu.memory_space<vmem>>, vector<16x96xf32>,
    } else {
    }
    return
  }
  func.func @transform_0(%arg0: i32, %arg1: i32, %arg2: i32) -> (i32, i32) {
    %c0_i32 = arith.constant 0 : i32
    return %arg0, %arg2 : i32, i32
  }
  func.func @transform_1(%arg0: i32, %arg1: i32, %arg2: i32) -> (i32, i32) {
    %c0_i32 = arith.constant 0 : i32
    return %arg2, %arg1 : i32, i32
  }
  func.func @transform_2(%arg0: i32, %arg1: i32, %arg2: i32) -> (i32, i32) {
    %c0_i32 = arith.constant 0 : i32
    %c0_i32_0 = arith.constant 0 : i32
    return %c0_i32, %arg1 : i32, i32
  }
  func.func @transform_3(%arg0: i32, %arg1: i32, %arg2: i32) -> (i32, i32) {
    %c0_i32 = arith.constant 0 : i32
    return %arg0, %arg1 : i32, i32
  }
}

</mosaic_0001>

<llo_original>
// kernel: tpu_custom_call.1
$region0: #{tpu_custom_call.1}
  #allocation0 [shape = 'u32[]', space=smem, size = 0x4, offset = 0x4, fixed_abs, tag = 'smem constant byte address 0x4 - core index']
  #allocation1 [shape = 'u32[144,128]{1,0:T(1,128)}', space=vmem, size = 0x12000, scoped, tag = 'internal scratch']
  #allocation2 [shape = 'f32[16,96]{1,0:T(8,128)}', space=vmem, size = 0x2000, scoped, tag = 'scratch operand']
  %s0 = inlined_call_operand.hbm [shape: f32[16,32], index: 0, kind: input, shape index: {}]
  %s1 = inlined_call_operand.hbm [shape: f32[32,96], index: 1, kind: input, shape index: {}]
  %s2 = inlined_call_operand.vmem [shape: f32[1,96], index: 2, kind: input, shape index: {}]
  %s3 = inlined_call_operand.hbm [shape: f32[16,96], index: 3, kind: output, shape index: {}]
  %s4 = sld [smem:[#allocation0]]
  $region38: #{tpu_custom_call.1} parent=0
    _
  %s6 = ssub.s32 1, %s4
  %s7 = scalar_select 0, %s6, %s4
  $region1: #{tpu_custom_call.1} parent=0
    #allocation3 [shape = 'u8[8192]{0}', space=vmem, size = 0x2000, scoped, tag = 'input window, operand 0, single buffered']
    #allocation4 [shape = 's32[1]{0}', space=sflag, size = 0x4, scoped, tag = 'scoped memory for tpu_custom_call.1']
    #allocation5 [shape = 's32[1]{0}', space=sflag, size = 0x4, scoped, tag = 'scoped memory for tpu_custom_call.1']
    #allocation6 [shape = 'u8[16384]{0}', space=vmem, size = 0x4000, scoped, tag = 'input window, operand 1, single buffered']
    #allocation7 [shape = 's32[1]{0}', space=sflag, size = 0x4, scoped, tag = 'scoped memory for tpu_custom_call.1']
    #allocation8 [shape = 'u8[8192]{0}', space=vmem, size = 0x2000, scoped, tag = 'output window, operand 0, single buffered']
    %8 = vsyncpa [#allocation4], 0
    %9 = vsyncpa [#allocation7], 0
    %10 = vsyncpa [#allocation5], 0
    // Predicated region
    $region2: #{tpu_custom_call.1} parent=1 // pred_check
      _
    $region3: #{tpu_custom_call.1} parent=1 // pred_check_branch
      %12 = sbr.rel (0) target = $region5
    $region4: #{tpu_custom_call.1} parent=1 // pred_region
      %s14 = ssub.s32 256, 256
      %15 = vsyncadd [#allocation4], %s14
      %s16 = sshll.u32 [#allocation3], 4
      %s17 = int_to_ptr.vmem [resolvable:$true] %s16
      %22 = dma.hbm_to_vmem [thread:$0]  %s0, 256, %s17, [#allocation4], 128, 128, 8
    $region5: #{tpu_custom_call.1} parent=1 // pred_fallthru
      _
    // Predicated region
    $region6: #{tpu_custom_call.1} parent=1 // pred_check
      _
    $region7: #{tpu_custom_call.1} parent=1 // pred_check_branch
      %24 = sbr.rel (0) target = $region9
    $region8: #{tpu_custom_call.1} parent=1 // pred_region
      %s26 = ssub.s32 512, 512
      %27 = vsyncadd [#allocation7], %s26
      %s28 = sshll.u32 [#allocation6], 4
      %s29 = int_to_ptr.vmem [resolvable:$true] %s28
      %34 = dma.hbm_to_vmem [thread:$0]  %s1, 512, %s29, [#allocation7], 128, 128, 8
    $region9: #{tpu_custom_call.1} parent=1 // pred_fallthru
      _
    // Predicated region
    $region10: #{tpu_custom_call.1} parent=1 // pred_check
      _
    $region11: #{tpu_custom_call.1} parent=1 // pred_check_branch
      %36 = sbr.rel (0) target = $region13
    $region12: #{tpu_custom_call.1} parent=1 // pred_region
      _
    $region13: #{tpu_custom_call.1} parent=1 // pred_fallthru
      _
    // Predicated region
    $region14: #{tpu_custom_call.1} parent=1 // pred_check
      _
    $region15: #{tpu_custom_call.1} parent=1 // pred_check_branch
      %38 = sbr.rel (0) target = $region17
    $region16: #{tpu_custom_call.1} parent=1 // pred_region
      %39 = dma.done [#allocation4], 256
    $region17: #{tpu_custom_call.1} parent=1 // pred_fallthru
      _
    // Predicated region
    $region18: #{tpu_custom_call.1} parent=1 // pred_check
      _
    $region19: #{tpu_custom_call.1} parent=1 // pred_check_branch
      %41 = sbr.rel (0) target = $region21
    $region20: #{tpu_custom_call.1} parent=1 // pred_region
      %42 = dma.done [#allocation7], 512
    $region21: #{tpu_custom_call.1} parent=1 // pred_fallthru
      _
    %p43 = scmp.eq.s32.totalorder 0, 0
    // Predicated region
    $region22: #{tpu_custom_call.1} parent=1 // pred_check
      %p44 = pneg %p43
    $region23: #{tpu_custom_call.1} parent=1 // pred_check_branch
      %46 = sbr.rel (%p44) target = $region25
    $region24: #{tpu_custom_call.1} parent=1 // pred_region
      %vm47 = vcmask 785408
      %48 = vst.msk [vmem:[#allocation2] sm:$0xff] %vm47, 0.0
      %49 = vst.msk [vmem:[#allocation2 + $0x8] sm:$0xff] %vm47, 0.0
    $region25: #{tpu_custom_call.1} parent=1 // pred_fallthru
      _
    %v50 = vld [vmem:[#allocation2] sm:$0xff]
    %v51 = vld [vmem:[#allocation2 + $0x8] sm:$0xff]
    %v52 = vld [vmem:[#allocation3] sm:$0xff]
    %v53 = vld [vmem:[#allocation3 + $0x8] sm:$0xff]
    %v54 = vld [vmem:[#allocation6] sm:$0xff]
    %v55 = vld [vmem:[#allocation6 + $0x8] sm:$0xff]
    %v56 = vld [vmem:[#allocation6 + $0x10] sm:$0xff]
    %v57 = vld [vmem:[#allocation6 + $0x18] sm:$0xff]
    %vm58 = vcmask 261120
    %v60 = vsel %vm58, %v52, 0
    %v63 = vsel %vm58, %v53, 0
    %65 = vmatprep.subr.mxu0 0.0
    %66 = vmatpush1.msra.mxu0 %v54
    %67 = vmatprep.subr.mxu0 0.0
    %68 = vmatpush1.msra.mxu0 %v55
    %69 = vmatprep.subr.mxu0 0.0
    %70 = vmatpush1.msra.mxu0 %v56
    %71 = vmatprep.subr.mxu0 0.0
    %72 = vmatpush1.msra.mxu0 %v57
    %73 = vmatprep.subr.mxu0 0.0
    %74 = vmatpush1.msra.mxu0 0.0
    %75 = vmatprep.subr.mxu0 0.0
    %76 = vmatpush1.msra.mxu0 0.0
    %77 = vmatprep.subr.mxu0 0.0
    %78 = vmatpush1.msra.mxu0 0.0
    %79 = vmatprep.subr.mxu0 0.0
    %80 = vmatpush1.msra.mxu0 0.0
    %81 = vmatprep.subr.mxu0 0.0
    %82 = vmatpush1.msra.mxu0 0.0
    %83 = vmatprep.subr.mxu0 0.0
    %84 = vmatpush1.msra.mxu0 0.0
    %85 = vmatprep.subr.mxu0 0.0
    %86 = vmatpush1.msra.mxu0 0.0
    %87 = vmatprep.subr.mxu0 0.0
    %88 = vmatpush1.msra.mxu0 0.0
    %89 = vmatprep.subr.mxu0 0.0
    %90 = vmatpush1.msra.mxu0 0.0
    %91 = vmatprep.subr.mxu0 0.0
    %92 = vmatpush1.msra.mxu0 0.0
    %93 = vmatprep.subr.mxu0 0.0
    %94 = vmatpush1.msra.mxu0 0.0
    %95 = vmatprep.subr.mxu0 0.0
    %96 = vmatpush1.msra.mxu0 0.0
    %97 = vmatprep.subr.mxu0 0.0
    %98 = vmatpush1.msra.mxu0 0.0
    %99 = vmatprep.subr.mxu0 0.0
    %100 = vmatpush1.msra.mxu0 0.0
    %101 = vmatprep.subr.mxu0 0.0
    %102 = vmatpush1.msra.mxu0 0.0
    %103 = vmatprep.subr.mxu0 0.0
    %104 = vmatpush1.msra.mxu0 0.0
    %105 = vmatprep.subr.mxu0 0.0
    %106 = vmatpush1.msra.mxu0 0.0
    %107 = vmatprep.subr.mxu0 0.0
    %108 = vmatpush1.msra.mxu0 0.0
    %109 = vmatprep.subr.mxu0 0.0
    %110 = vmatpush1.msra.mxu0 0.0
    %111 = vmatprep.subr.mxu0 0.0
    %112 = vmatpush1.msra.mxu0 0.0
    %113 = vmatprep.subr.mxu0 0.0
    %114 = vmatpush1.msra.mxu0 0.0
    %115 = vmatprep.subr.mxu0 0.0
    %116 = vmatpush1.msra.mxu0 0.0
    %117 = vmatprep.subr.mxu0 0.0
    %118 = vmatpush1.msra.mxu0 0.0
    %119 = vmatprep.subr.mxu0 0.0
    %120 = vmatpush1.msra.mxu0 0.0
    %121 = vmatprep.subr.mxu0 0.0
    %122 = vmatpush1.msra.mxu0 0.0
    %123 = vmatprep.subr.mxu0 0.0
    %124 = vmatpush1.msra.mxu0 0.0
    %125 = vmatprep.subr.mxu0 0.0
    %126 = vmatpush1.msra.mxu0 0.0
    %127 = vmatprep.subr.mxu0 0.0
    %128 = vmatpush1.msra.mxu0 0.0
    %129 = vmatprep.mubr.f32.mxu0 0.0
    %130 = vmatmul.mubr.f32.gmra.mrb[0].mxu0 %v60
    %v131 = vpop.f32.mrb[0].mxu0
    %v132 = vadd.f32 0.0, %v131
    %v133 = vpop.f32.mrb[0].mxu0
    %134 = vmatprep.mubr.f32.mxu0 0.0
    %135 = vmatmul.mubr.f32.gmra.mrb[0].mxu0 %v63
    %v136 = vpop.f32.mrb[0].mxu0
    %v137 = vadd.f32 0.0, %v136
    %v138 = vpop.f32.mrb[0].mxu0
    %139 = vdwg.mxu0
    %v140 = vadd.f32 %v50, %v132
    %v141 = vadd.f32 %v51, %v137
    %vm142 = vcmask 785408
    %143 = vst.msk [vmem:[#allocation2] sm:$0xff] %vm142, %v140
    %144 = vst.msk [vmem:[#allocation2 + $0x8] sm:$0xff] %vm142, %v141
    // Predicated region
    $region26: #{tpu_custom_call.1} parent=1 // pred_check
      %p145 = pneg %p43
    $region27: #{tpu_custom_call.1} parent=1 // pred_check_branch
      %147 = sbr.rel (%p145) target = $region29
    $region28: #{tpu_custom_call.1} parent=1 // pred_region
      %v148 = vld [vmem:[#allocation2] sm:$0xff]
      %v149 = vld [vmem:[#allocation2 + $0x8] sm:$0xff]
      %v150 = vld [vmem:[%s2] sm:$0x1]
      %v152 = vlaneseq
      %v153 = vshrl.u32 %v152, 7
      %v154 = vsub.s32 0, %v153
      %v155 = vrot.slane %v150, %v154
      %v157 = vadd.f32 %v148, %v155
      %v158 = vadd.f32 %v149, %v155
      %159 = vst.msk [vmem:[#allocation8] sm:$0xff] %vm142, %v157
      %160 = vst.msk [vmem:[#allocation8 + $0x8] sm:$0xff] %vm142, %v158
    $region29: #{tpu_custom_call.1} parent=1 // pred_fallthru
      _
    // Predicated region
    $region30: #{tpu_custom_call.1} parent=1 // pred_check
      _
    $region31: #{tpu_custom_call.1} parent=1 // pred_check_branch
      %162 = sbr.rel (0) target = $region33
    $region32: #{tpu_custom_call.1} parent=1 // pred_region
      %s164 = ssub.s32 256, 256
      %165 = vsyncadd [#allocation5], %s164
      %s166 = sshll.u32 [#allocation8], 4
      %s167 = int_to_ptr.vmem [resolvable:$true] %s166
      %172 = dma.vmem_to_hbm [thread:$0]  %s167, 256, %s3, [#allocation5], 128, 128, 8
    $region33: #{tpu_custom_call.1} parent=1 // pred_fallthru
      _
    // Predicated region
    $region34: #{tpu_custom_call.1} parent=1 // pred_check
      _
    $region35: #{tpu_custom_call.1} parent=1 // pred_check_branch
      %174 = sbr.rel (0) target = $region37
    $region36: #{tpu_custom_call.1} parent=1 // pred_region
      %175 = dma.done [#allocation5], 256
    $region37: #{tpu_custom_call.1} parent=1 // pred_fallthru
      _
    %176 = vsyncpa [#allocation4], 1
    %177 = vsyncpa [#allocation7], 1
    %178 = vsyncpa [#allocation5], 1

</llo_original>
